<compile_context>
chip_gen: v5e
topology: v5e:2x2
jax: 0.10.0
libtpu: 0.0.40
codegen_flags: <defaults>
</compile_context>

<pallas_src>
import numpy as np
import jax
import jax.numpy as jnp
from jax.experimental import pallas as pl
from jax.experimental.pallas import tpu as pltpu


def _vmem_limit_bytes():
    try:
        cap = int(pltpu.get_tpu_info().vmem_capacity_bytes)
        return min((cap * 3) // 4, 100 * 1024 * 1024)
    except Exception:
        return 48 * 1024 * 1024


_VMEM_LIMIT = _vmem_limit_bytes()


def _pick_tile(total, target):
    """Largest lane-tile <= target that divides `total` (multiple of 128 when possible)."""
    if total <= target:
        return total
    t = (target // 128) * 128
    while t >= 128:
        if total % t == 0:
            return t
        t -= 128
    return total


# ----------------------------------------------------------------------------
# Kernel 1: channels-major pointwise (1x1) conv == matmul + bias
#           out (1, Cout, Mt) = W (Cout, Cin) @ x (1, Cin, Mt) + b (Cout, 1)
# ----------------------------------------------------------------------------
def _cm_conv_kernel(x_ref, w_ref, b_ref, o_ref):
    o_ref[0] = (jnp.dot(w_ref[...], x_ref[0], preferred_element_type=jnp.float32)
                + b_ref[...]).astype(o_ref.dtype)


def channels_major_conv(x, w, b, *, tile_target=8192):
    """x: (N, Cin, M), w: (Cout, Cin), b: (Cout, 1) -> (N, Cout, M). Lane-dense output."""
    N, Cin, M = x.shape
    Cout = w.shape[0]
    Mt = _pick_tile(M, tile_target)
    return pl.pallas_call(
        _cm_conv_kernel,
        out_shape=jax.ShapeDtypeStruct((N, Cout, M), jnp.float32),
        grid_spec=pltpu.PrefetchScalarGridSpec(
            num_scalar_prefetch=0,
            grid=(N, M // Mt),
            in_specs=[
                pl.BlockSpec((1, Cin, Mt), lambda n, m: (n, 0, m)),
                pl.BlockSpec((Cout, Cin), lambda n, m: (0, 0)),
                pl.BlockSpec((Cout, 1), lambda n, m: (0, 0)),
            ],
            out_specs=pl.BlockSpec((1, Cout, Mt), lambda n, m: (n, 0, m)),
        ),
        compiler_params=pltpu.CompilerParams(
            dimension_semantics=("parallel", "parallel"),
            vmem_limit_bytes=_VMEM_LIMIT),
    )(x, w, b)


# ----------------------------------------------------------------------------
# Kernel 2: op.integrate_tensor_2d for the hip joint.
#   Only the hip row is DMA'd ((1,1,HW) block selected via the index_map);
#   the coordinate table is lane-dense (2, HW); expectation = VPU mul + lane reduce.
# ----------------------------------------------------------------------------
def _make_hip_softargmax_kernel(scale):
    def kernel(feat_ref, grid_ref, out_ref):
        hm = feat_ref[0] * scale                                   # (1, HW)
        m = jnp.max(hm, axis=-1, keepdims=True)
        e = jnp.exp(hm - m)
        denom = jnp.sum(e, axis=-1, keepdims=True)                 # (1, 1)
        ex = jnp.sum(e * grid_ref[0:1, :], axis=-1, keepdims=True)  # (1, 1) x
        ey = jnp.sum(e * grid_ref[1:2, :], axis=-1, keepdims=True)  # (1, 1) y
        out_ref[...] = jnp.concatenate([ex, ey], axis=-1) / denom   # exact: 2 divides
    return kernel


def hip_softargmax_2d(features, grid_xy, *, joint, scale):
    """features: (N, J, HW); grid_xy: (2, HW) [x; y] -> (N, 2)."""
    N, J, HW = features.shape
    return pl.pallas_call(
        _make_hip_softargmax_kernel(float(scale)),
        out_shape=jax.ShapeDtypeStruct((N, 2), jnp.float32),
        grid_spec=pltpu.PrefetchScalarGridSpec(
            num_scalar_prefetch=0,
            grid=(N,),
            in_specs=[
                pl.BlockSpec((1, 1, HW), lambda n: (n, joint, 0)),   # hip row only
                pl.BlockSpec((2, HW), lambda n: (0, 0)),
            ],
            out_specs=pl.BlockSpec((1, 2), lambda n: (n, 0)),
        ),
        compiler_params=pltpu.CompilerParams(
            dimension_semantics=("parallel",),
            vmem_limit_bytes=_VMEM_LIMIT),
    )(features, grid_xy)


# ----------------------------------------------------------------------------
# Kernel 3: op.unproject_heatmaps + softmax-over-views aggregation + V2V-stub
#   (1x1x1 channel mix), all fused.
#   grid = (B, P_tiles, V); V is the innermost reduction axis with an online
#   elementwise softmax held in VMEM scratch.
#   Projection: 12 scalar FMAs from SMEM (scalar prefetch).
#   Bilinear grid_sample (align_corners=True, zeros padding) realised separably,
#   per joint: (fH,fW)@(fW,Pt) on the MXU (bf16 in, f32 acc) then a wy-weighted
#   sublane reduce on the VPU — peak temporary is (fH,Pt), not (J*fH,Pt).
# ----------------------------------------------------------------------------
def _make_unproject_kernel(J, fH, fW):
    inv_fH = 1.0 / float(fH)
    inv_fW = 1.0 / float(fW)

    def kernel(proj_sm, coord_ref, heat_ref, wv_ref, bv_ref, out_ref,
               vol_sc, m_sc, l_sc, s_sc):
        b = pl.program_id(0)
        v_i = pl.program_id(2)
        n_views = pl.num_programs(2)

        @pl.when(v_i == 0)
        def _():
            m_sc[...] = jnp.full(m_sc.shape, -jnp.inf, m_sc.dtype)
            l_sc[...] = jnp.zeros_like(l_sc)
            s_sc[...] = jnp.zeros_like(s_sc)

        coords = coord_ref[0]                                      # (3, Pt) world coords
        Pt = coords.shape[-1]
        c0, c1, c2 = coords[0:1, :], coords[1:2, :], coords[2:3, :]

        # Projection: 12 scalar-broadcast FMAs, proj values read from SMEM.
        base = (b * n_views + v_i) * 12
        def pv(k):
            return proj_sm[base + k]
        x = pv(0) * c0 + pv(1) * c1 + pv(2) * c2 + pv(3)
        y = pv(4) * c0 + pv(5) * c1 + pv(6) * c2 + pv(7)
        z = pv(8) * c0 + pv(9) * c1 + pv(10) * c2 + pv(11)

        invalid = z <= 0.0
        zsafe = jnp.where(invalid, 1.0, z)                         # matches reference
        xp = x / zsafe                                             # exact divide
        yp = y / zsafe
        # Reference normalizes x by heatmap_shape[0] and y by heatmap_shape[1]
        # (only equivalent to the usual convention because fH == fW in this model).
        gx = 2.0 * (xp * inv_fH - 0.5)
        gy = 2.0 * (yp * inv_fW - 0.5)
        ix = (gx + 1.0) * (0.5 * float(fW - 1))                    # (1, Pt) width coord
        iy = (gy + 1.0) * (0.5 * float(fH - 1))                    # (1, Pt) height coord

        # Separable triangle (bilinear, zeros padding) weights
        wcol = jax.lax.broadcasted_iota(jnp.float32, (fW, Pt), 0)
        hrow = jax.lax.broadcasted_iota(jnp.float32, (fH, Pt), 0)
        wx = jnp.maximum(0.0, 1.0 - jnp.abs(wcol - ix)).astype(jnp.bfloat16)  # (fW, Pt)
        wy = jnp.maximum(0.0, 1.0 - jnp.abs(hrow - iy))            # (fH, Pt) f32

        # Per-joint separable contraction; wx is the stationary RHS across joints.
        for j in range(J):                                         # static unroll
            heat_j = heat_ref[0, v_i * J + j]                      # (fH, fW) bf16
            tmp = jnp.dot(heat_j, wx,
                          preferred_element_type=jnp.float32)      # (fH, Pt) MXU
            vol_sc[j:j + 1, :] = jnp.sum(tmp * wy, axis=0, keepdims=True)

        vol = jnp.where(invalid, 0.0, vol_sc[...])                 # (J, Pt)

        # Online elementwise softmax over the view axis (fused aggregation).
        m_prev = m_sc[...]
        m_new = jnp.maximum(m_prev, vol)
        alpha = jnp.exp(m_prev - m_new)
        e = jnp.exp(vol - m_new)
        l_sc[...] = l_sc[...] * alpha + e
        s_sc[...] = s_sc[...] * alpha + e * vol
        m_sc[...] = m_new

        @pl.when(v_i == n_views - 1)
        def _():
            agg = s_sc[...] / l_sc[...]                            # (J, Pt), exact
            # Fused V2V-stub 1x1x1 channel mix: (J, J) @ (J, Pt) + bias.
            out_ref[0] = (jnp.dot(wv_ref[...], agg, preferred_element_type=jnp.float32)
                          + bv_ref[...]).astype(out_ref.dtype)
    return kernel


def unproject_aggregate_v2v(heat_rs, proj_flat, coord_t, w_v2v, b_v2v,
                            *, J, fH, fW, V, tile_target=2048):
    """heat_rs: (B, V*J, fH, fW) bf16; proj_flat: (B*V*12,) f32 (SMEM prefetch);
       coord_t: (B, 3, P) f32; w_v2v: (J, J); b_v2v: (J, 1) -> (B, J, P) f32."""
    B = heat_rs.shape[0]
    P = coord_t.shape[-1]
    Pt = _pick_tile(P, tile_target)
    return pl.pallas_call(
        _make_unproject_kernel(J, fH, fW),
        out_shape=jax.ShapeDtypeStruct((B, J, P), jnp.float32),
        grid_spec=pltpu.PrefetchScalarGridSpec(
            num_scalar_prefetch=1,
            grid=(B, P // Pt, V),                      # view (reduction) axis innermost
            in_specs=[
                pl.BlockSpec((1, 3, Pt), lambda b, p, v, pj: (b, 0, p)),
                # All-views heat block: DMA'd once per batch element, VMEM-resident.
                pl.BlockSpec((1, V * J, fH, fW), lambda b, p, v, pj: (b, 0, 0, 0)),
                pl.BlockSpec((J, J), lambda b, p, v, pj: (0, 0)),
                pl.BlockSpec((J, 1), lambda b, p, v, pj: (0, 0)),
            ],
            out_specs=pl.BlockSpec((1, J, Pt), lambda b, p, v, pj: (b, 0, p)),
            scratch_shapes=[pltpu.VMEM((J, Pt), jnp.float32)] * 4,
        ),
        compiler_params=pltpu.CompilerParams(
            dimension_semantics=("parallel", "parallel", "arbitrary"),
            vmem_limit_bytes=_VMEM_LIMIT),
    )(proj_flat, coord_t, heat_rs, w_v2v, b_v2v)


# ----------------------------------------------------------------------------
# Kernel 4: op.integrate_tensor_3d_with_coordinates, tiled over P.
#   Pass A: online softmax reduction -> keypoints (J,3), global max M, denom L.
#           Coordinates are lane-dense (3, Pt); numerator = 3 VPU mul + lane reduces.
#   Pass B: fully-parallel normalization writing the softmax'd volume.
# ----------------------------------------------------------------------------
def _make_vol_reduce_kernel(multiplier):
    def kernel(vol_ref, coord_ref, kp_ref, mx_ref, lg_ref, m_sc, l_sc, n_sc):
        p_i = pl.program_id(1)

        @pl.when(p_i == 0)
        def _():
            m_sc[...] = jnp.full(m_sc.shape, -jnp.inf, m_sc.dtype)
            l_sc[...] = jnp.zeros_like(l_sc)
            n_sc[...] = jnp.zeros_like(n_sc)

        v = vol_ref[0] * multiplier                                # (J, Pt)
        m_prev = m_sc[...]
        m_new = jnp.maximum(m_prev, jnp.max(v, axis=-1, keepdims=True))
        alpha = jnp.exp(m_prev - m_new)                            # (J, 1)
        e = jnp.exp(v - m_new)                                     # (J, Pt)
        l_sc[...] = l_sc[...] * alpha + jnp.sum(e, axis=-1, keepdims=True)
        sums = [jnp.sum(e * coord_ref[0, k:k + 1, :], axis=-1, keepdims=True)
                for k in range(3)]                                 # 3 x (J, 1)
        n_sc[...] = n_sc[...] * alpha + jnp.concatenate(sums, axis=-1)
        m_sc[...] = m_new

        @pl.when(p_i == pl.num_programs(1) - 1)
        def _():
            kp_ref[0] = n_sc[...] / l_sc[...]                      # exact
            mx_ref[0] = m_sc[...]
            lg_ref[0] = l_sc[...]
    return kernel


def _make_vol_normalize_kernel(multiplier):
    def kernel(vol_ref, mx_ref, lg_ref, sm_ref):
        v = vol_ref[0] * multiplier
        inv_l = 1.0 / lg_ref[0]                                    # (J, 1) exact divide
        sm_ref[0] = (jnp.exp(v - mx_ref[0]) * inv_l).astype(sm_ref.dtype)
    return kernel


def integrate_tensor_3d_with_coordinates(vol, coord_t, multiplier, *, tile_target=4096):
    """vol: (B, J, P); coord_t: (B, 3, P) -> ((B, J, 3) keypoints, (B, J, P) softmax vol)."""
    B, J, P = vol.shape
    Pt = _pick_tile(P, tile_target)
    nPt = P // Pt

    kp, mx, lg = pl.pallas_call(
        _make_vol_reduce_kernel(float(multiplier)),
        out_shape=(jax.ShapeDtypeStruct((B, J, 3), jnp.float32),
                   jax.ShapeDtypeStruct((B, J, 1), jnp.float32),
                   jax.ShapeDtypeStruct((B, J, 1), jnp.float32)),
        grid_spec=pltpu.PrefetchScalarGridSpec(
            num_scalar_prefetch=0,
            grid=(B, nPt),
            in_specs=[
                pl.BlockSpec((1, J, Pt), lambda b, p: (b, 0, p)),
                pl.BlockSpec((1, 3, Pt), lambda b, p: (b, 0, p)),
            ],
            out_specs=(pl.BlockSpec((1, J, 3), lambda b, p: (b, 0, 0)),
                       pl.BlockSpec((1, J, 1), lambda b, p: (b, 0, 0)),
                       pl.BlockSpec((1, J, 1), lambda b, p: (b, 0, 0))),
            scratch_shapes=[pltpu.VMEM((J, 1), jnp.float32),
                            pltpu.VMEM((J, 1), jnp.float32),
                            pltpu.VMEM((J, 3), jnp.float32)],
        ),
        compiler_params=pltpu.CompilerParams(
            dimension_semantics=("parallel", "arbitrary"),
            vmem_limit_bytes=_VMEM_LIMIT),
    )(vol, coord_t)

    sm = pl.pallas_call(
        _make_vol_normalize_kernel(float(multiplier)),
        out_shape=jax.ShapeDtypeStruct((B, J, P), jnp.float32),
        grid_spec=pltpu.PrefetchScalarGridSpec(
            num_scalar_prefetch=0,
            grid=(B, nPt),
            in_specs=[
                pl.BlockSpec((1, J, Pt), lambda b, p: (b, 0, p)),
                pl.BlockSpec((1, J, 1), lambda b, p: (b, 0, 0)),
                pl.BlockSpec((1, J, 1), lambda b, p: (b, 0, 0)),
            ],
            out_specs=pl.BlockSpec((1, J, Pt), lambda b, p: (b, 0, p)),
        ),
        compiler_params=pltpu.CompilerParams(
            dimension_semantics=("parallel", "parallel"),
            vmem_limit_bytes=_VMEM_LIMIT),
    )(vol, mx, lg)

    return kp, sm


# ----------------------------------------------------------------------------
# Plain-JAX glue
# ----------------------------------------------------------------------------
def triangulate_point_dlt(proj, points, conf):
    # proj (V,3,4), points (V,2) in full-image pixels, conf (V,)
    # TODO(synk): SVD-based DLT triangulation has no Pallas equivalent; plain JAX.
    A = proj[:, 2:3, :] * points[:, :, None] - proj[:, :2, :]       # (V, 2, 4)
    A = A * conf[:, None, None]
    A = A.reshape(-1, 4)
    _, _, vt = jnp.linalg.svd(A, full_matrices=False)
    homo = -vt[3, :]
    return homo[:3] / homo[3]


def forward(images, proj_full, proj_feat, params, cfg):
    B, V, C, H, W = images.shape
    J = cfg['num_joints']
    vs = cfg['volume_size']
    BV = B * V

    # TODO(synk): full HRNet-W48 wholebody backbone not translated; stand-in =
    # 4x4 average-pool downsample (plain JAX) + 1x1 conv fused with the keypoint head below.
    imgs = images.reshape(BV, C, H, W)
    fH, fW = H // 4, W // 4
    pooled = imgs.reshape(BV, C, fH, 4, fW, 4).mean(axis=(3, 5)).reshape(BV, C, fH * fW)

    # Fused backbone-stub conv (C->48) + keypoint_head Conv2d(48, J, 1): no nonlinearity
    # between them in this stub, so the weights are pre-composed into one matmul.
    w_eff = params['w_kp'] @ params['w_bb']                        # (J, C)
    b_eff = params['w_kp'] @ params['b_bb'] + params['b_kp']       # (J, 1)
    features = channels_major_conv(pooled, w_eff, b_eff)           # (BV, J, fH*fW)
    features_bv = features.reshape(B, V, J, fH, fW)

    # hip heatmap (joint 6) 2D soft-argmax (x100 and channel select fused into the kernel)
    xs = jnp.tile(jnp.arange(fW, dtype=jnp.float32), fH)
    ys = jnp.repeat(jnp.arange(fH, dtype=jnp.float32), fW)
    grid_xy = jnp.stack([xs, ys], axis=0)                          # (2, HW) lane-dense
    hip2d = hip_softargmax_2d(features, grid_xy, joint=6, scale=100.0)   # (BV, 2)
    hip2d = hip2d.reshape(B, V, 2) * 4.0                           # module hardcodes 512/128

    alg_conf = jnp.ones((B, V), jnp.float32)
    base_points = jax.vmap(triangulate_point_dlt)(proj_full, hip2d, alg_conf)   # (B, 3)

    # coordinate volumes (eval mode: theta = 0 -> identity rotation), built lane-dense (B,3,P)
    sides = jnp.array([cfg['cuboid_side'] * 0.75,
                       cfg['cuboid_side'] * 0.75,
                       cfg['cuboid_side']], jnp.float32)
    position = base_points - sides / 2.0                           # (B, 3)
    g = jnp.arange(vs, dtype=jnp.float32)
    xxx, yyy, zzz = jnp.meshgrid(g, g, g, indexing='ij')
    grid3 = jnp.stack([xxx, yyy, zzz], axis=0).reshape(3, -1)      # (3, P)
    step = sides / float(vs - 1)
    coord_t = position[:, :, None] + grid3[None, :, :] * step[None, :, None]   # (B, 3, P)
    coord_volumes = coord_t.transpose(0, 2, 1).reshape(B, vs, vs, vs, 3)

    # unproject heatmaps into voxel volumes + softmax view aggregation + V2V stub (one kernel)
    proj_flat = proj_feat.reshape(B * V * 12)                      # SMEM scalar prefetch
    heat_rs = features.reshape(B, V * J, fH, fW).astype(jnp.bfloat16)   # bf16 once, in HBM
    volumes = unproject_aggregate_v2v(heat_rs, proj_flat, coord_t,
                                      params['w_v2v'], params['b_v2v'],
                                      J=J, fH=fH, fW=fW, V=V)      # (B, J, P)

    vol_kp3d, volumes_sm = integrate_tensor_3d_with_coordinates(
        volumes, coord_t, cfg['volume_multiplier'])
    volumes_out = volumes_sm.reshape(B, J, vs, vs, vs)

    vol_confidences = None
    return vol_kp3d, features_bv, volumes_out, vol_confidences, coord_volumes, base_points


# ----------------------------------------------------------------------------
if __name__ == "__main__":
    B, V, C, H, W = 2, 2, 3, 64, 64
    J, vs = 8, 8
    cfg = dict(num_joints=J, volume_size=vs, cuboid_side=20.0, volume_multiplier=1.0)

    key = jax.random.PRNGKey(0)
    k1, k2, k3, k4 = jax.random.split(key, 4)
    images = jax.random.normal(k1, (B, V, C, H, W), jnp.float32)

    params = {
        'w_bb': 0.1 * jax.random.normal(k2, (48, C), jnp.float32),   # (Cout, Cin)
        'b_bb': jnp.zeros((48, 1), jnp.float32),
        'w_kp': 0.1 * jax.random.normal(k3, (J, 48), jnp.float32),
        'b_kp': 0.01 * jnp.ones((J, 1), jnp.float32),
        'w_v2v': 0.1 * jax.random.normal(k4, (J, J), jnp.float32),
        'b_v2v': jnp.zeros((J, 1), jnp.float32),
    }

    # deterministic synthetic cameras (projection = K @ [R | t]); feature-space
    # projections correspond to Camera.update_after_resize((H,W) -> (H/4,W/4)).
    def make_proj(angle, dist, f, cx, cy):
        c, s = np.cos(angle), np.sin(angle)
        R = np.array([[c, 0.0, s], [0.0, 1.0, 0.0], [-s, 0.0, c]], np.float32)
        t = np.array([0.0, 0.0, dist], np.float32)
        K = np.array([[f, 0.0, cx], [0.0, f, cy], [0.0, 0.0, 1.0]], np.float32)
        return (K @ np.concatenate([R, t[:, None]], axis=1)).astype(np.float32)

    projs = np.stack([make_proj(0.3 + v_i * np.pi / 2.0, 60.0, 80.0, W / 2, H / 2)
                      for v_i in range(V)], axis=0)                   # (V, 3, 4)
    proj_full = jnp.asarray(np.broadcast_to(projs, (B, V, 3, 4)).copy())
    S = np.diag([(W // 4) / W, (H // 4) / H, 1.0]).astype(np.float32)
    proj_feat = jnp.asarray(np.broadcast_to(S @ projs, (B, V, 3, 4)).copy())

    outs = forward(images, proj_full, proj_feat, params, cfg)
    outs = jax.block_until_ready(outs)

    vol_kp3d, features_bv, volumes_out, vol_conf, coord_volumes, base_points = outs

    # cuboids (host-side bookkeeping, as in the reference module)
    sides_np = np.array([cfg['cuboid_side'] * 0.75, cfg['cuboid_side'] * 0.75,
                         cfg['cuboid_side']], np.float32)
    cuboids = [(np.asarray(base_points)[b] - sides_np / 2, sides_np) for b in range(B)]

    assert vol_kp3d.shape == (B, J, 3)
    assert features_bv.shape == (B, V, J, H // 4, W // 4)
    assert volumes_out.shape == (B, J, vs, vs, vs)
    assert coord_volumes.shape == (B, vs, vs, vs, 3)
    assert base_points.shape == (B, 3)
    assert np.all(np.isfinite(np.asarray(vol_kp3d)))
    assert np.all(np.isfinite(np.asarray(volumes_out)))
    print("KERNEL_OK")
</pallas_src>

<mosaic_0001>
module attributes {stable_mosaic.version = 11 : i64} {
  func.func @_cm_conv_kernel(%arg0: i32, %arg1: i32, %arg2: memref<1x3x256xf32, #tpu.memory_space<vmem>>, %arg3: memref<8x3xf32, #tpu.memory_space<vmem>>, %arg4: memref<8x1xf32, #tpu.memory_space<vmem>>, %arg5: memref<1x8x256xf32, #tpu.memory_space<vmem>>) attributes {dimension_semantics = [#tpu.dimension_semantics<parallel>, #tpu.dimension_semantics<parallel>], iteration_bounds = array<i64: 4, 1>, scalar_prefetch = 0 : i64, scratch_operands = 0 : i64, tpu.core_type = #tpu.core_type<tc>, window_params = [{transform_indices = @transform_0, window_bounds = array<i64: 1, 3, 256>}, {pipeline_mode = #tpu.pipeline_mode<synchronous>, transform_indices = @transform_1, window_bounds = array<i64: 8, 3>}, {pipeline_mode = #tpu.pipeline_mode<synchronous>, transform_indices = @transform_2, window_bounds = array<i64: 8, 1>}, {transform_indices = @transform_3, window_bounds = array<i64: 1, 8, 256>}]} {
    %c0 = arith.constant 0 : index
    %c0_0 = arith.constant 0 : index
    %0 = vector.load %arg3[%c0, %c0_0] : memref<8x3xf32, #tpu.memory_space<vmem>>, vector<8x3xf32>
    %c0_1 = arith.constant 0 : index
    %c0_2 = arith.constant 0 : index
    %c0_3 = arith.constant 0 : index
    %1 = vector.load %arg2[%c0_1, %c0_2, %c0_3] : memref<1x3x256xf32, #tpu.memory_space<vmem>>, vector<1x3x256xf32>
    %2 = vector.shape_cast %1 : vector<1x3x256xf32> to vector<3x256xf32>
    %cst = arith.constant dense<0.000000e+00> : vector<8x256xf32>
    %3 = tpu.matmul %0, %2, %cst {dimension_numbers = #tpu.dot_dimension_numbers<[1], [0], [0], [1], [0, 0, 1, 1], [], []>} : vector<8x3xf32>, vector<3x256xf32>, vector<8x256xf32> -> vector<8x256xf32>
    %c0_4 = arith.constant 0 : index
    %c0_5 = arith.constant 0 : index
    %4 = vector.load %arg4[%c0_4, %c0_5] : memref<8x1xf32, #tpu.memory_space<vmem>>, vector<8x1xf32>
    %5 = vector.broadcast %4 : vector<8x1xf32> to vector<8x256xf32>
    %6 = arith.addf %3, %5 : vector<8x256xf32>
    %c0_6 = arith.constant 0 : index
    %c0_7 = arith.constant 0 : index
    %c0_8 = arith.constant 0 : index
    %7 = vector.load %arg5[%c0_6, %c0_7, %c0_8] : memref<1x8x256xf32, #tpu.memory_space<vmem>>, vector<1x8x256xf32>
    %8 = vector.shape_cast %7 : vector<1x8x256xf32> to vector<8x256xf32>
    %9 = vector.shape_cast %6 : vector<8x256xf32> to vector<1x8x256xf32>
    tpu.vector_store %arg5[%c0_6, %c0_7, %c0_8], %9 {strides = array<i32>} : memref<1x8x256xf32, #tpu.memory_space<vmem>>, vector<1x8x256xf32>,
    return
  }
  func.func @transform_0(%arg0: i32, %arg1: i32) -> (i32, i32, i32) {
    %c0_i32 = arith.constant 0 : i32
    %c0_i32_0 = arith.constant 0 : i32
    return %arg0, %c0_i32, %arg1 : i32, i32, i32
  }
  func.func @transform_1(%arg0: i32, %arg1: i32) -> (i32, i32) {
    %c0_i32 = arith.constant 0 : i32
    %c0_i32_0 = arith.constant 0 : i32
    %c0_i32_1 = arith.constant 0 : i32
    return %c0_i32, %c0_i32_0 : i32, i32
  }
  func.func @transform_2(%arg0: i32, %arg1: i32) -> (i32, i32) {
    %c0_i32 = arith.constant 0 : i32
    %c0_i32_0 = arith.constant 0 : i32
    %c0_i32_1 = arith.constant 0 : i32
    return %c0_i32, %c0_i32_0 : i32, i32
  }
  func.func @transform_3(%arg0: i32, %arg1: i32) -> (i32, i32, i32) {
    %c0_i32 = arith.constant 0 : i32
    %c0_i32_0 = arith.constant 0 : i32
    return %arg0, %c0_i32, %arg1 : i32, i32, i32
  }
}

</mosaic_0001>

<llo_original>
// kernel: tpu_custom_call.1
$region0: #{tpu_custom_call.1}
  #allocation0 [shape = 'u32[]', space=smem, size = 0x4, offset = 0x4, fixed_abs, tag = 'smem constant byte address 0x4 - core index']
  #allocation1 [shape = 'u32[72,128]{1,0:T(1,128)}', space=vmem, size = 0x9000, scoped, tag = 'internal scratch']
  %s0 = inlined_call_operand.vmem [shape: f32[4,3,256], index: 0, kind: input, shape index: {}]
  %s1 = inlined_call_operand.vmem [shape: f32[8,3], index: 1, kind: input, shape index: {}]
  %s2 = inlined_call_operand.vmem [shape: f32[8,1], index: 2, kind: input, shape index: {}]
  %s3 = inlined_call_operand.hbm [shape: f32[4,8,256], index: 3, kind: output, shape index: {}]
  %s4 = sld [smem:[#allocation0]]
  $region45: #{tpu_custom_call.1} parent=0
    _
  %s6 = ssub.s32 1, %s4
  %s7 = scalar_select 0, %s6, %s4
  $region1: #{tpu_custom_call.1} parent=0
    #allocation2 [shape = 'u8[16384]{0}', space=vmem, size = 0x4000, scoped, tag = 'output window, operand 0']
    #allocation3 [shape = 's32[2]{0}', space=sflag, size = 0x8, scoped, tag = 'scoped memory for tpu_custom_call.1']
    %8 = vsyncpa [#allocation3], 0
    %s9 = scalar_lea.sflag [#allocation3], 1
    %10 = vsyncpa %s9, 0
    loop: start=0, step=1, limit=6
    $region2: #{tpu_custom_call.1} parent=1 // loop_pre_header
      _
    $region3: #{tpu_custom_call.1} parent=1 // loop_header
      %s12 = sphi 0, %s16
      %p13 = scmp.ge.s32.totalorder %s12, 6
      %s19 = sphi 0, %s31
      %s20 = sphi 0, %s27
      %s21 = sphi 0, %s19
      %s22 = sphi 0, %s20
      %s23 = sphi 0, %s21
      %s24 = sphi 0, %s22
      %s36 = sphi 0, %s38
      %s39 = sphi 0, %s36
      %s40 = sphi 0, %s39
      %s56 = sphi 0, %s40
      %s60 = sphi 0, %s60
      %s62 = sphi 0, %s60
      %s63 = sphi 0, %s62
      %s77 = sphi 0, %s63
      %s81 = sphi 0, %s81
      %s83 = sphi 0, %s81
      %s84 = sphi 0, %s83
      %s98 = sphi 0, %s84
      %s106 = sphi 0, %s108
      %s109 = sphi 0, %s106
      %s110 = sphi 0, %s109
      %s126 = sphi 0, %s110
    $region4: #{tpu_custom_call.1} parent=1 // loop_header_branch
      %15 = sbr.rel (%p13) target = $region8
    $region5: #{tpu_custom_call.1} parent=1 // loop_body
      %s17 = ssub.s32 %s12, 1
      %s18 = ssub.s32 %s12, 2
      %s25 = sadd.s32 1, %s20
      %p26 = scmp.ge.s32.totalorder %s25, 1
      %s27 = scalar_select %p26, 0, %s25
      %s28 = sadd.s32 1, %s19
      %s29 = scalar_select %p26, %s28, %s19
      %p30 = scmp.ge.s32.totalorder %s29, 4
      %s31 = scalar_select %p30, 0, %s29
      %s32 = ssub.s32 %s19, %s31
      %s33 = ssub.s32 %s20, %s27
      %s34 = sor.u32 %s32, %s33
      %p35 = scmp.eq.s32.totalorder %s34, 0
      %s37 = sadd.s32 %s36, 1
      %s38 = scalar_select %p35, %s36, %s37
      %p41 = pneg %p35
      %p42 = scmp.eq.s32.totalorder %s12, 3
      %p43 = por %p41, %p42
      %p44 = scmp.ne.s32.totalorder %s36, %s39
      %p45 = scmp.eq.s32.totalorder %s12, 0
      %p46 = por %p44, %p45
      %p47 = scmp.ne.s32.totalorder %s36, %s39
      %p48 = scmp.eq.s32.totalorder %s17, 3
      %p49 = por %p47, %p48
      %p50 = scmp.ne.s32.totalorder %s39, %s40
      %p51 = scmp.eq.s32.totalorder %s17, 0
      %p52 = por %p50, %p51
      %p53 = scmp.ne.s32.totalorder %s39, %s40
      %p54 = scmp.eq.s32.totalorder %s18, 3
      %p55 = por %p53, %p54
      %p57 = scmp.ne.s32.totalorder %s40, %s56
      %p58 = scmp.eq.s32.totalorder %s18, 0
      %p59 = por %p57, %p58
      %s61 = sadd.s32 %s60, 1
      %p64 = scmp.eq.s32.totalorder %s12, 3
      %p65 = scmp.ne.s32.totalorder %s60, %s62
      %p66 = scmp.eq.s32.totalorder %s12, 0
      %p67 = por %p65, %p66
      %p68 = scmp.ne.s32.totalorder %s60, %s62
      %p69 = scmp.eq.s32.totalorder %s17, 3
      %p70 = por %p68, %p69
      %p71 = scmp.ne.s32.totalorder %s62, %s63
      %p72 = scmp.eq.s32.totalorder %s17, 0
      %p73 = por %p71, %p72
      %p74 = scmp.ne.s32.totalorder %s62, %s63
      %p75 = scmp.eq.s32.totalorder %s18, 3
      %p76 = por %p74, %p75
      %p78 = scmp.ne.s32.totalorder %s63, %s77
      %p79 = scmp.eq.s32.totalorder %s18, 0
      %p80 = por %p78, %p79
      %s82 = sadd.s32 %s81, 1
      %p85 = scmp.eq.s32.totalorder %s12, 3
      %p86 = scmp.ne.s32.totalorder %s81, %s83
      %p87 = scmp.eq.s32.totalorder %s12, 0
      %p88 = por %p86, %p87
      %p89 = scmp.ne.s32.totalorder %s81, %s83
      %p90 = scmp.eq.s32.totalorder %s17, 3
      %p91 = por %p89, %p90
      %p92 = scmp.ne.s32.totalorder %s83, %s84
      %p93 = scmp.eq.s32.totalorder %s17, 0
      %p94 = por %p92, %p93
      %p95 = scmp.ne.s32.totalorder %s83, %s84
      %p96 = scmp.eq.s32.totalorder %s18, 3
      %p97 = por %p95, %p96
      %p99 = scmp.ne.s32.totalorder %s84, %s98
      %p100 = scmp.eq.s32.totalorder %s18, 0
      %p101 = por %p99, %p100
      %s102 = ssub.s32 %s19, %s31
      %s103 = ssub.s32 %s20, %s27
      %s104 = sor.u32 %s102, %s103
      %p105 = scmp.eq.s32.totalorder %s104, 0
      %s107 = sadd.s32 %s106, 1
      %s108 = scalar_select %p105, %s106, %s107
      %p111 = pneg %p105
      %p112 = scmp.eq.s32.totalorder %s12, 3
      %p113 = por %p111, %p112
      %p114 = scmp.ne.s32.totalorder %s106, %s109
      %p115 = scmp.eq.s32.totalorder %s12, 0
      %p116 = por %p114, %p115
      %p117 = scmp.ne.s32.totalorder %s106, %s109
      %p118 = scmp.eq.s32.totalorder %s17, 3
      %p119 = por %p117, %p118
      %p120 = scmp.ne.s32.totalorder %s109, %s110
      %p121 = scmp.eq.s32.totalorder %s17, 0
      %p122 = por %p120, %p121
      %p123 = scmp.ne.s32.totalorder %s109, %s110
      %p124 = scmp.eq.s32.totalorder %s18, 3
      %p125 = por %p123, %p124
      %p127 = scmp.ne.s32.totalorder %s110, %s126
      %p128 = scmp.eq.s32.totalorder %s18, 0
      %p129 = por %p127, %p128
      %p130 = scmp.le.s32.totalorder 1, %s12
      %p131 = scmp.lt.s32.totalorder %s12, 5
      %p132 = pnand %p130, %p131
      %p133 = pneg %p132
      // Predicated region
      $region9: #{tpu_custom_call.1} parent=5 // pred_check
        _
      $region10: #{tpu_custom_call.1} parent=5 // pred_check_branch
        %135 = sbr.rel (%p132) target = $region12
      $region11: #{tpu_custom_call.1} parent=5 // pred_region
        %s136 = ssub.s32 %s12, 1
        // Predicated region
        $region13: #{tpu_custom_call.1} parent=11 // pred_check
          %p137 = pneg %p73
        $region14: #{tpu_custom_call.1} parent=11 // pred_check_branch
          %139 = sbr.rel (%p137) target = $region16
        $region15: #{tpu_custom_call.1} parent=11 // pred_region
          _
        $region16: #{tpu_custom_call.1} parent=11 // pred_fallthru
          _
        // Predicated region
        $region17: #{tpu_custom_call.1} parent=11 // pred_check
          %p140 = pneg %p94
        $region18: #{tpu_custom_call.1} parent=11 // pred_check_branch
          %142 = sbr.rel (%p140) target = $region20
        $region19: #{tpu_custom_call.1} parent=11 // pred_region
          _
        $region20: #{tpu_custom_call.1} parent=11 // pred_fallthru
          _
      $region12: #{tpu_custom_call.1} parent=5 // pred_fallthru
        _
      %p143 = scmp.lt.s32.totalorder %s12, 4
      // Predicated region
      $region21: #{tpu_custom_call.1} parent=5 // pred_check
        %p144 = pneg %p143
      $region22: #{tpu_custom_call.1} parent=5 // pred_check_branch
        %146 = sbr.rel (%p144) target = $region24
      $region23: #{tpu_custom_call.1} parent=5 // pred_region
        // Predicated region
        $region25: #{tpu_custom_call.1} parent=23 // pred_check
          %p147 = pneg %p46
        $region26: #{tpu_custom_call.1} parent=23 // pred_check_branch
          %149 = sbr.rel (%p147) target = $region28
        $region27: #{tpu_custom_call.1} parent=23 // pred_region
          %s150 = smul.u32 2, %s20
          %p151 = scmp.lt.s32.totalorder %s19, 3
          %s152 = scalar_select %p151, %s19, 3
          %p153 = scmp.lt.s32.totalorder %s150, 1
          %s154 = scalar_select %p153, %s150, 1
          %s155 = smul.addr %s152, 2
          %s156 = sadd.s32 %s154, %s155
          %s157 = smul.addr %s156, 4
          %s158 = scalar_lea.vmem %s0, %s157
          %s159 = smul.u32 2, %s20
        $region28: #{tpu_custom_call.1} parent=23 // pred_fallthru
          _
      $region24: #{tpu_custom_call.1} parent=5 // pred_fallthru
        _
      %p160 = scmp.le.s32.totalorder 1, %s12
      %p161 = scmp.lt.s32.totalorder %s12, 5
      %p162 = pnand %p160, %p161
      %p163 = pneg %p162
      // Predicated region
      $region29: #{tpu_custom_call.1} parent=5 // pred_check
        _
      $region30: #{tpu_custom_call.1} parent=5 // pred_check_branch
        %165 = sbr.rel (%p162) target = $region32
      $region31: #{tpu_custom_call.1} parent=5 // pred_region
        %s166 = ssub.s32 %s12, 1
        %s167 = smul.u32 2, %s22
        %p168 = scmp.lt.s32.totalorder %s21, 3
        %s169 = scalar_select %p168, %s21, 3
        %p170 = scmp.lt.s32.totalorder %s167, 1
        %s171 = scalar_select %p170, %s167, 1
        %s172 = smul.addr %s169, 2
        %s173 = sadd.s32 %s171, %s172
        %s174 = smul.addr %s173, 4
        %s175 = scalar_lea.vmem %s0, %s174
        %p176 = pneg %p52
        %p177 = pneg %p49
        %p178 = pneg %p73
        %p179 = pneg %p70
        %p180 = pneg %p94
        %p181 = pneg %p91
        %p182 = pneg %p122
        %p183 = pneg %p119
        %s184 = sand.u32 %s109, 1
        %s185 = scalar_lea.sflag [#allocation3], %s184
        %s186 = sand.u32 %s109, 1
        %s187 = smul.addr %s186, 16
        %s188 = scalar_lea.vmem [#allocation2], %s187
        %s189 = smul.u32 2, %s22
        %p190 = scmp.lt.s32.totalorder %s21, 3
        %s191 = scalar_select %p190, %s21, 3
        %p192 = scmp.lt.s32.totalorder %s189, 1
        %s193 = scalar_select %p192, %s189, 1
        %s194 = smul.addr %s191, 2
        %s195 = sadd.s32 %s193, %s194
        %s196 = smul.addr %s195, 4
        %s197 = scalar_lea.vmem %s0, %s196
        %s198 = smul.u32 2, %s22
        %s199 = smul.u32 2, %s22
        %v200 = vld [vmem:[%s1] sm:$0xff]
        %v201 = vld [vmem:[%s197] sm:$0x77]
        %v202 = vld [vmem:[%s2] sm:$0xff]
        %204 = vset.pattern.permute.xlu0 0
        %205 = vperm.xlu0 %204, %v202
        %v206 = vpop.permute.xlu0 %205
        %209 = vst [vmem:[#allocation1] ss:$2 sm:$0xff] %v201
        %v210 = vld.sshfl [vmem:[#allocation1] sm:$0xff pattern:$0x75316420]
        %v211 = vld.sshfl [vmem:[#allocation1 + $0x8] sm:$0xff pattern:$0x75316420]
        %vm212 = vcmask 23552
        %v214 = vsel %vm212, %v200, 0
        %vm216 = vcmask 1042432
        %v217 = vsel %vm216, %v210, 0
        %v219 = vsel %vm216, %v211, 0
        %221 = vmatpush.msra.mxu0 0.0
        %222 = vmatpush.msra.mxu0 0.0
        %223 = vmatpush.msra.mxu0 0.0
        %224 = vmatpush.msra.mxu0 0.0
        %225 = vmatpush.msra.mxu0 0.0
        %226 = vmatpush.msra.mxu0 0.0
        %227 = vmatpush.msra.mxu0 0.0
        %228 = vmatpush.msra.mxu0 0.0
        %229 = vmatpush.msra.mxu0 0.0
        %230 = vmatpush.msra.mxu0 0.0
        %231 = vmatpush.msra.mxu0 0.0
        %232 = vmatpush.msra.mxu0 0.0
        %233 = vmatpush.msra.mxu0 0.0
        %234 = vmatpush.msra.mxu0 0.0
        %235 = vmatpush.msra.mxu0 0.0
        %236 = vmatpush.msra.mxu0 %v217
        %237 = vmatmul.f32.gmra.mxu0 %v214
        %v238 = vpop.f32.mrf.mxu0
        %v239 = vadd.f32 %v206, %v238
        %240 = vdwg.mxu0
        %241 = vmatpush.msra.mxu0 0.0
        %242 = vmatpush.msra.mxu0 0.0
        %243 = vmatpush.msra.mxu0 0.0
        %244 = vmatpush.msra.mxu0 0.0
        %245 = vmatpush.msra.mxu0 0.0
        %246 = vmatpush.msra.mxu0 0.0
        %247 = vmatpush.msra.mxu0 0.0
        %248 = vmatpush.msra.mxu0 0.0
        %249 = vmatpush.msra.mxu0 0.0
        %250 = vmatpush.msra.mxu0 0.0
        %251 = vmatpush.msra.mxu0 0.0
        %252 = vmatpush.msra.mxu0 0.0
        %253 = vmatpush.msra.mxu0 0.0
        %254 = vmatpush.msra.mxu0 0.0
        %255 = vmatpush.msra.mxu0 0.0
        %256 = vmatpush.msra.mxu0 %v219
        %257 = vmatmul.f32.gmra.mxu0 %v214
        %v258 = vpop.f32.mrf.mxu0
        %v259 = vadd.f32 %v206, %v258
        %260 = vdwg.mxu0
        %261 = vst [vmem:[%s188] sm:$0xff] %v239
        %262 = vst [vmem:[%s188 + $0x8] sm:$0xff] %v259
        %s263 = sand.u32 %s109, 1
        %s264 = scalar_lea.sflag [#allocation3], %s263
        %s265 = sand.u32 %s109, 1
        %s266 = smul.addr %s265, 16
        %s267 = scalar_lea.vmem [#allocation2], %s266
        // Predicated region
        $region33: #{tpu_custom_call.1} parent=31 // pred_check
          %p268 = pneg %p119
        $region34: #{tpu_custom_call.1} parent=31 // pred_check_branch
          %270 = sbr.rel (%p268) target = $region36
        $region35: #{tpu_custom_call.1} parent=31 // pred_region
          %s271 = smul.u32 2, %s22
          %273 = vsyncadd %s264, 0
          %s274 = smul.addr %s21, 2
          %s275 = sadd.s32 %s271, %s274
          %s276 = smul.addr %s275, 8
          %s277 = scalar_lea.hbm %s3, %s276
          %s279 = sshll.u32 %s267, 4
          %s280 = int_to_ptr.vmem [resolvable:$true] %s279
          %s281 = sshll.u32 %s277, 4
          %s282 = int_to_ptr.hbm [resolvable:$true] %s281
          %284 = dma.vmem_to_hbm [thread:$0]  %s280, 256, %s282, %s264
        $region36: #{tpu_custom_call.1} parent=31 // pred_fallthru
          _
      $region32: #{tpu_custom_call.1} parent=5 // pred_fallthru
        _
      %p285 = scmp.le.s32.totalorder 2, %s12
      // Predicated region
      $region37: #{tpu_custom_call.1} parent=5 // pred_check
        %p286 = pneg %p285
      $region38: #{tpu_custom_call.1} parent=5 // pred_check_branch
        %288 = sbr.rel (%p286) target = $region40
      $region39: #{tpu_custom_call.1} parent=5 // pred_region
        %s289 = ssub.s32 %s12, 2
        // Predicated region
        $region41: #{tpu_custom_call.1} parent=39 // pred_check
          %p290 = pneg %p125
        $region42: #{tpu_custom_call.1} parent=39 // pred_check_branch
          %292 = sbr.rel (%p290) target = $region44
        $region43: #{tpu_custom_call.1} parent=39 // pred_region
          %s293 = sand.u32 %s110, 1
          %s294 = scalar_lea.sflag [#allocation3], %s293
          %s295 = sand.u32 %s110, 1
          %s296 = smul.addr %s295, 16
          %s297 = scalar_lea.vmem [#allocation2], %s296
          %299 = dma.done %s294, 256
        $region44: #{tpu_custom_call.1} parent=39 // pred_fallthru
          _
      $region40: #{tpu_custom_call.1} parent=5 // pred_fallthru
        _
    $region6: #{tpu_custom_call.1} parent=1 // loop_footer
      %s16 = sadd.s32 1, %s12
    $region7: #{tpu_custom_call.1} parent=1 // loop_footer_branch
      %11 = sbr.rel target = $region3
    $region8: #{tpu_custom_call.1} parent=1 // loop_exit
      _
    %300 = vsyncpa [#allocation3], 1
    %s301 = scalar_lea.sflag [#allocation3], 1
    %302 = vsyncpa %s301, 1

</llo_original>
